<compile_context>
chip_gen: v7x
topology: tpu7x:2x2x1
jax: 0.10.0
libtpu: 0.0.40
codegen_flags: <defaults>
</compile_context>

<pallas_src>
import jax
import jax.numpy as jnp
from jax.experimental import pallas as pl
from jax.experimental.pallas import tpu as pltpu


def _linear_kernel(x_ref, w_ref, b_ref, o_ref):
    # x_ref: (tb, D) VMEM  -- batch rows on sublanes, features on lanes
    # w_ref: (1, D)  SMEM  -- per-feature scalar weights
    # b_ref: (1, 1)  SMEM  -- scalar bias
    # o_ref: (tb, 1) VMEM  -- one output value per batch row
    x = x_ref[...]                                  # (tb, D) single tile load
    D = x.shape[1]                                  # static (== degree)
    acc = x[:, 0:1] * w_ref[0, 0]                   # scalar-broadcast multiply
    for j in range(1, D):                           # unrolled: D is tiny/static
        acc = acc + x[:, j:j + 1] * w_ref[0, j]
    o_ref[...] = (acc + b_ref[0, 0]).astype(o_ref.dtype)


def _round_up(n, m):
    return ((n + m - 1) // m) * m


def mymodel_forward(x, weight, bias, *, tile_b=8192):
    """Forward for MyModel: y = x @ W^T + b.

    x: (B, D) f32, weight: (1, D) f32, bias: (1,) f32 -> (B, 1) f32.
    """
    B, D = x.shape
    w2d = weight.reshape(1, D).astype(jnp.float32)   # SMEM weights
    b2d = bias.reshape(1, 1).astype(jnp.float32)     # SMEM scalar bias

    # Row tile: multiple of 8 sublanes, capped at (rounded-up) batch size.
    tb = max(8, min(_round_up(tile_b, 8), _round_up(B, 8)))
    # Keep at least 2 grid steps for large batches so v7x's two TensorCores
    # both get work (the axis is marked "parallel").
    if B >= 2048 and pl.cdiv(B, tb) < 2:
        tb = max(8, _round_up(pl.cdiv(B, 2), 8))
    grid = (pl.cdiv(B, tb),)

    out = pl.pallas_call(
        _linear_kernel,
        out_shape=jax.ShapeDtypeStruct((B, 1), jnp.float32),
        grid_spec=pltpu.PrefetchScalarGridSpec(
            num_scalar_prefetch=0,
            grid=grid,
            in_specs=[
                pl.BlockSpec((tb, D), lambda i: (i, 0)),            # x tile
                pl.BlockSpec(memory_space=pltpu.MemorySpace.SMEM),  # weight
                pl.BlockSpec(memory_space=pltpu.MemorySpace.SMEM),  # bias
            ],
            out_specs=pl.BlockSpec((tb, 1), lambda i: (i, 0)),
        ),
        compiler_params=pltpu.CompilerParams(
            dimension_semantics=("parallel",),
        ),
    )(x, w2d, b2d)
    return out


if __name__ == "__main__":
    degree = 3
    batch = 8

    key = jax.random.PRNGKey(0)
    kx, kw, kb, kx2, kx3 = jax.random.split(key, 5)

    # Deterministic "parameters" (nn.Linear(degree, 1) shapes): W (1, degree), b (1,)
    weight = jax.random.normal(kw, (1, degree), dtype=jnp.float32) * 0.1
    bias = jax.random.normal(kb, (1,), dtype=jnp.float32) * 0.1

    # Small input (batch, degree), matching the module's usage.
    x = jax.random.normal(kx, (batch, degree), dtype=jnp.float32)
    y = jax.block_until_ready(mymodel_forward(x, weight, bias))
    y_ref = x @ weight.T + bias
    assert y.shape == (batch, 1)
    assert jnp.allclose(y, y_ref, atol=1e-5, rtol=1e-5), "mismatch vs reference (small)"

    # Unaligned batch: exercises the partial boundary block (no jnp.pad copy).
    x2 = jax.random.normal(kx2, (1000, degree), dtype=jnp.float32)
    y2 = jax.block_until_ready(mymodel_forward(x2, weight, bias))
    y2_ref = x2 @ weight.T + bias
    assert y2.shape == (1000, 1)
    assert jnp.allclose(y2, y2_ref, atol=1e-5, rtol=1e-5), "mismatch vs reference (1000)"

    # Larger batch: multi-step parallel grid + partial last block.
    x3 = jax.random.normal(kx3, (20000, degree), dtype=jnp.float32)
    y3 = jax.block_until_ready(mymodel_forward(x3, weight, bias))
    y3_ref = x3 @ weight.T + bias
    assert y3.shape == (20000, 1)
    assert jnp.allclose(y3, y3_ref, atol=1e-5, rtol=1e-5), "mismatch vs reference (20000)"

    print("KERNEL_OK")
</pallas_src>

<mosaic_0001>
module attributes {stable_mosaic.version = 11 : i64} {
  func.func @_linear_kernel(%arg0: i32, %arg1: memref<8x3xf32, #tpu.memory_space<vmem>>, %arg2: memref<1x3xf32, #tpu.memory_space<smem>>, %arg3: memref<1x1xf32, #tpu.memory_space<smem>>, %arg4: memref<8x1xf32, #tpu.memory_space<vmem>>) attributes {dimension_semantics = [#tpu.dimension_semantics<parallel>], iteration_bounds = array<i64: 1>, scalar_prefetch = 0 : i64, scratch_operands = 0 : i64, tpu.core_type = #tpu.core_type<tc>, window_params = [{transform_indices = @transform_0, window_bounds = array<i64: 8, 3>}, {transform_indices = @transform_1, window_bounds = array<i64: 1, 3>}, {transform_indices = @transform_2, window_bounds = array<i64: 1, 1>}, {transform_indices = @transform_3, window_bounds = array<i64: 8, 1>}]} {
    %c0 = arith.constant 0 : index
    %c0_0 = arith.constant 0 : index
    %0 = vector.load %arg1[%c0, %c0_0] : memref<8x3xf32, #tpu.memory_space<vmem>>, vector<8x3xf32>
    %1 = vector.extract_strided_slice %0 {offsets = [0, 0], sizes = [8, 1], strides = [1, 1]} : vector<8x3xf32> to vector<8x1xf32>
    %c0_1 = arith.constant 0 : index
    %c0_2 = arith.constant 0 : index
    %2 = memref.load %arg2[%c0_1, %c0_2] : memref<1x3xf32, #tpu.memory_space<smem>>
    %3 = vector.broadcast %2 : f32 to vector<8x1xf32>
    %4 = arith.mulf %1, %3 : vector<8x1xf32>
    %5 = vector.extract_strided_slice %0 {offsets = [0, 1], sizes = [8, 1], strides = [1, 1]} : vector<8x3xf32> to vector<8x1xf32>
    %c0_3 = arith.constant 0 : index
    %c1 = arith.constant 1 : index
    %6 = memref.load %arg2[%c0_3, %c1] : memref<1x3xf32, #tpu.memory_space<smem>>
    %7 = vector.broadcast %6 : f32 to vector<8x1xf32>
    %8 = arith.mulf %5, %7 : vector<8x1xf32>
    %9 = arith.addf %4, %8 : vector<8x1xf32>
    %10 = vector.extract_strided_slice %0 {offsets = [0, 2], sizes = [8, 1], strides = [1, 1]} : vector<8x3xf32> to vector<8x1xf32>
    %c0_4 = arith.constant 0 : index
    %c2 = arith.constant 2 : index
    %11 = memref.load %arg2[%c0_4, %c2] : memref<1x3xf32, #tpu.memory_space<smem>>
    %12 = vector.broadcast %11 : f32 to vector<8x1xf32>
    %13 = arith.mulf %10, %12 : vector<8x1xf32>
    %14 = arith.addf %9, %13 : vector<8x1xf32>
    %c0_5 = arith.constant 0 : index
    %c0_6 = arith.constant 0 : index
    %15 = memref.load %arg3[%c0_5, %c0_6] : memref<1x1xf32, #tpu.memory_space<smem>>
    %16 = vector.broadcast %15 : f32 to vector<8x1xf32>
    %17 = arith.addf %14, %16 : vector<8x1xf32>
    %c0_7 = arith.constant 0 : index
    %c0_8 = arith.constant 0 : index
    %18 = vector.load %arg4[%c0_7, %c0_8] : memref<8x1xf32, #tpu.memory_space<vmem>>, vector<8x1xf32>
    tpu.vector_store %arg4[%c0_7, %c0_8], %17 {strides = array<i32>} : memref<8x1xf32, #tpu.memory_space<vmem>>, vector<8x1xf32>,
    return
  }
  func.func @transform_0(%arg0: i32) -> (i32, i32) {
    %c0_i32 = arith.constant 0 : i32
    %c0_i32_0 = arith.constant 0 : i32
    return %arg0, %c0_i32 : i32, i32
  }
  func.func @transform_1(%arg0: i32) -> (i32, i32) {
    %c0_i32 = arith.constant 0 : i32
    %c0_i32_0 = arith.constant 0 : i32
    %c0_i32_1 = arith.constant 0 : i32
    return %c0_i32, %c0_i32_0 : i32, i32
  }
  func.func @transform_2(%arg0: i32) -> (i32, i32) {
    %c0_i32 = arith.constant 0 : i32
    %c0_i32_0 = arith.constant 0 : i32
    %c0_i32_1 = arith.constant 0 : i32
    return %c0_i32, %c0_i32_0 : i32, i32
  }
  func.func @transform_3(%arg0: i32) -> (i32, i32) {
    %c0_i32 = arith.constant 0 : i32
    %c0_i32_0 = arith.constant 0 : i32
    return %arg0, %c0_i32 : i32, i32
  }
}

</mosaic_0001>

<llo_original>
// kernel: tpu_custom_call.1
$region0: #{tpu_custom_call.1}
  #allocation0 [shape = 'u32[]', space=smem, size = 0x4, offset = 0x4, fixed_abs, tag = 'smem constant byte address 0x4 - core index']
  #allocation1 [shape = 'u32[144,128]{1,0:T(1,128)}', space=vmem, size = 0x12000, scoped, tag = 'internal scratch']
  #allocation2 [shape = 'f32[1,1]{1,0:T(1,128)S(6)}', space=smem, size = 0x200, scoped, tag = 'scoped memory for tpu_custom_call.1']
  %s0 = inlined_call_operand.vmem [shape: f32[8,3], index: 0, kind: input, shape index: {}]
  %s1 = inlined_call_operand.vmem [shape: f32[1,3], index: 1, kind: input, shape index: {}]
  %s2 = inlined_call_operand.<no memory space> [shape: f32[1,1], index: 2, kind: input, shape index: {}]
  %s3 = inlined_call_operand.vmem [shape: f32[8,1], index: 3, kind: output, shape index: {}]
  %s4 = sld [smem:[#allocation0]]
  $region26: #{tpu_custom_call.1} parent=0
    _
  %s6 = ssub.s32 1, %s4
  %s7 = scalar_select 0, %s6, %s4
  %8 = sst [smem:[#allocation2]] %s2
  $region1: #{tpu_custom_call.1} parent=0
    #allocation3 [shape = 'u8[512]{0}', space=smem, size = 0x200, scoped, tag = 'input window, operand 1, single buffered']
    #allocation4 [shape = 's32[1]{0}', space=sflag, size = 0x4, scoped, tag = 'scoped memory for tpu_custom_call.1']
    %9 = vsyncpa [#allocation4], 0
    // Predicated region
    $region2: #{tpu_custom_call.1} parent=1 // pred_check
      _
    $region3: #{tpu_custom_call.1} parent=1 // pred_check_branch
      %11 = sbr.rel (0) target = $region5
    $region4: #{tpu_custom_call.1} parent=1 // pred_region
      _
    $region5: #{tpu_custom_call.1} parent=1 // pred_fallthru
      _
    // Predicated region
    $region6: #{tpu_custom_call.1} parent=1 // pred_check
      _
    $region7: #{tpu_custom_call.1} parent=1 // pred_check_branch
      %13 = sbr.rel (0) target = $region9
    $region8: #{tpu_custom_call.1} parent=1 // pred_region
      %s15 = ssub.s32 16, 16
      %16 = vsyncadd [#allocation4], %s15
      %s18 = sshll.u32 %s1, 4
      %s19 = int_to_ptr.vmem [resolvable:$true] %s18
      %21 = dma.vmem_to_smem %s19, 16, [#allocation3], [#allocation4]
    $region9: #{tpu_custom_call.1} parent=1 // pred_fallthru
      _
    // Predicated region
    $region10: #{tpu_custom_call.1} parent=1 // pred_check
      _
    $region11: #{tpu_custom_call.1} parent=1 // pred_check_branch
      %23 = sbr.rel (0) target = $region13
    $region12: #{tpu_custom_call.1} parent=1 // pred_region
      _
    $region13: #{tpu_custom_call.1} parent=1 // pred_fallthru
      _
    // Predicated region
    $region14: #{tpu_custom_call.1} parent=1 // pred_check
      _
    $region15: #{tpu_custom_call.1} parent=1 // pred_check_branch
      %25 = sbr.rel (0) target = $region17
    $region16: #{tpu_custom_call.1} parent=1 // pred_region
      %26 = dma.done [#allocation4], 16
    $region17: #{tpu_custom_call.1} parent=1 // pred_fallthru
      _
    %27 = sfence
    %v28 = vld [vmem:[%s0] sm:$0xff]
    %s29 = sld [smem:[#allocation3]]
    %v30 = vstv %s29
    %v31 = vmul.f32 %v28, %v30
    %s32 = sld [smem:[#allocation3 + $0x1]]
    %v33 = vstv %s32
    %v34 = vmul.f32 %v28, %v33
    %36 = vrot.lane.b32.xlu0 %v34, 127
    %v37 = vpop.permute.xlu0 %36
    %v39 = vadd.f32 %v31, %v37
    %s40 = sld [smem:[#allocation3 + $0x2]]
    %v41 = vstv %s40
    %v42 = vmul.f32 %v28, %v41
    %44 = vrot.lane.b32.xlu0 %v42, 126
    %v45 = vpop.permute.xlu0 %44
    %v47 = vadd.f32 %v39, %v45
    %s48 = sld [smem:[#allocation2]]
    %v49 = vstv %s48
    %v50 = vadd.f32 %v47, %v49
    %vm51 = vcmask 7168
    %52 = vst.msk [vmem:[%s3] sm:$0xff] %vm51, %v50
    // Predicated region
    $region18: #{tpu_custom_call.1} parent=1 // pred_check
      _
    $region19: #{tpu_custom_call.1} parent=1 // pred_check_branch
      %54 = sbr.rel (0) target = $region21
    $region20: #{tpu_custom_call.1} parent=1 // pred_region
      _
    $region21: #{tpu_custom_call.1} parent=1 // pred_fallthru
      _
    // Predicated region
    $region22: #{tpu_custom_call.1} parent=1 // pred_check
      _
    $region23: #{tpu_custom_call.1} parent=1 // pred_check_branch
      %56 = sbr.rel (0) target = $region25
    $region24: #{tpu_custom_call.1} parent=1 // pred_region
      _
    $region25: #{tpu_custom_call.1} parent=1 // pred_fallthru
      _
    %57 = vsyncpa [#allocation4], 1

</llo_original>
